<compile_context>
chip_gen: v7x
topology: tpu7x:2x2x1
jax: 0.10.0
libtpu: 0.0.40
codegen_flags: <defaults>
</compile_context>

<pallas_src>
import jax
import jax.numpy as jnp
from jax import lax
from jax.experimental import pallas as pl
from jax.experimental.pallas import tpu as pltpu


def _make_conv3d_kernel(k0, k1, T, H, W, rows_per_block):
    p0 = (k0 - 1) // 2
    p1 = (k1 - 1) // 2
    HW = H * W
    R = rows_per_block  # fused (batch * T) rows in one block

    def kernel(w_ref, b_ref, x_ref, o_ref):
        # w_ref: SMEM (k0*k1*k1,)  flattened conv weight
        # b_ref: SMEM (1,)         bias
        # x_ref: VMEM (R, H*W)     fused (batch*T, H*W) lane-dense input slab
        # o_ref: VMEM (R, H*W)     fused lane-dense output slab
        x = x_ref[...].astype(jnp.float32)  # in-kernel cast; no-op for f32

        # Per-lane / per-row coordinates for the replicate-edge masks
        # (computed once per grid step).
        lane = lax.broadcasted_iota(jnp.int32, (R, HW), 1)
        row = lax.broadcasted_iota(jnp.int32, (R, HW), 0)
        t_in_batch = row % T           # time index within each fused batch
        w_in_row = lane % W
        is_w_first = w_in_row == 0
        is_w_last = w_in_row == (W - 1)
        is_h_first = lane < W
        is_h_last = lane >= (H - 1) * W
        is_t_first = t_in_batch == 0
        is_t_last = t_in_batch == (T - 1)

        def unit_shift(v, axis, size, step, edge_mask):
            # y[i] = v[i + step] for interior i; replicated at the edge.
            # pltpu.roll follows jnp.roll semantics (out[i] = in[i - shift]),
            # so a shift of (-step) mod size reads "step" elements ahead.
            rolled = pltpu.roll(v, (-step) % size, axis=axis)
            return jnp.where(edge_mask, v, rolled)

        def shift_t(v, d):
            # Roll over the fused R = Bb*T row axis; the (row % T) edge masks
            # protect batch boundaries, so batches never leak into each other.
            return unit_shift(v, 0, R, d, is_t_last if d > 0 else is_t_first)

        def shift_h(v, d):  # one H row == W lanes in the flattened layout
            return unit_shift(v, 1, HW, d * W,
                              is_h_last if d > 0 else is_h_first)

        def shift_w(v, d):
            return unit_shift(v, 1, HW, d,
                              is_w_last if d > 0 else is_w_first)

        def clip_shift(v, d, unit):
            # Replicate ("edge") clipped shift by d == |d| composed unit
            # clipped shifts.  For kernels >= 5 (|d| >= 2) this could be a
            # single roll + one select against an edge-replicated slab; it is
            # a no-op for the k = 3 case exercised here.
            for _ in range(abs(d)):
                v = unit(v, 1 if d > 0 else -1)
            return v

        # k0*k1 independent 3-term (kw) chains, tree-reduced afterwards:
        # keeps the 4 VALU slots busy (no f32 FMA on v5e/v6e) instead of a
        # long serial dependent add chain.
        partials = []
        for kt in range(k0):
            xt = clip_shift(x, kt - p0, shift_t)        # hoisted per-kt slab
            for kh in range(k1):
                xth = clip_shift(xt, kh - p1, shift_h)  # hoisted per-(kt,kh)
                acc = None
                for kw_ in range(k1):
                    tap = clip_shift(xth, kw_ - p1, shift_w)
                    wv = w_ref[(kt * k1 + kh) * k1 + kw_]
                    term = wv * tap
                    acc = term if acc is None else acc + term
                partials.append(acc)
        while len(partials) > 1:
            nxt = [partials[i] + partials[i + 1]
                   for i in range(0, len(partials) - 1, 2)]
            if len(partials) % 2:
                nxt.append(partials[-1])
            partials = nxt

        o_ref[...] = (partials[0] + b_ref[0]).astype(o_ref.dtype)

    return kernel


def conv3dc_forward(x, weight, bias, kernel_size):
    """x: [B, T, H, W]; weight: [1, 1, k0, k1, k1]; bias: [1].

    Returns [B, 1, T, H, W] in x.dtype, matching Conv3dC (nn.Conv3d with
    replicate padding, return_squeezed=False)."""
    k0, k1 = kernel_size
    if (k0 % 2 != 1) or (k1 % 2 != 1):
        raise ValueError(
            f"Conv3dC Pallas kernel supports odd kernel sizes only, got {kernel_size}"
        )
    B, T, H, W = x.shape
    HW = H * W

    # Lane-dense layout: fuse (B, T) -> rows and (H, W) -> lanes.  Both are
    # metadata-only reshapes of a contiguous array (no HBM traffic), and the
    # input keeps its native dtype (cast happens in-kernel).
    x_flat = x.reshape(B * T, HW)
    w_flat = weight.reshape(-1).astype(jnp.float32)   # (k0*k1*k1,)
    b_flat = bias.reshape(-1).astype(jnp.float32)     # (1,)

    # Prefer 2 balanced grid steps so ("parallel",) shards across both v7x
    # TensorCores; the extra ~0.35 us step on 1-TC v5e/v6e is negligible.
    # Block rows must stay a multiple of 8 (sublane tiling) unless we take
    # the whole array as one block.
    if B % 2 == 0 and ((B // 2) * T) % 8 == 0:
        n_blocks = 2
    else:
        n_blocks = 1
    rows_per_block = (B * T) // n_blocks

    kern = _make_conv3d_kernel(k0, k1, T, H, W, rows_per_block)

    # VMEM budget derived from the actual block sizes: 2x double-buffered
    # in/out blocks + live f32 temporaries (x slab, hoisted taps, k0*k1
    # partials) with 2x slack, clamped to [16 MiB, 40 MiB] so it always stays
    # below v7x's 64 MiB physical VMEM.
    itemsize = jnp.dtype(x.dtype).itemsize
    io_block_bytes = rows_per_block * HW * itemsize
    f32_block_bytes = rows_per_block * HW * 4
    vmem_need = 4 * io_block_bytes + (k0 * k1 + 4) * f32_block_bytes
    vmem_limit = int(min(max(2 * vmem_need, 16 << 20), 40 << 20))

    out_flat = pl.pallas_call(
        kern,
        out_shape=jax.ShapeDtypeStruct((B * T, HW), x.dtype),
        grid=(n_blocks,),
        in_specs=[
            pl.BlockSpec(memory_space=pltpu.MemorySpace.SMEM),      # weights
            pl.BlockSpec(memory_space=pltpu.MemorySpace.SMEM),      # bias
            pl.BlockSpec((rows_per_block, HW), lambda i: (i, 0)),   # input slab
        ],
        out_specs=pl.BlockSpec((rows_per_block, HW), lambda i: (i, 0)),
        compiler_params=pltpu.CompilerParams(
            dimension_semantics=("parallel",),
            vmem_limit_bytes=vmem_limit,
        ),
    )(w_flat, b_flat, x_flat)

    # TODO(synk): for production T*H*W, additionally tile over T with p0-row
    # halos (DMA-side replicate) so kt taps become row slices (vld) instead of
    # sublane rolls, with a v7x-specific (64 MiB) T-tile size.

    # nn.Conv3d keeps the (singleton) channel axis: [B, 1, T, H, W].
    return out_flat.reshape(B, T, H, W)[:, None]


def _reference_forward(x, weight, bias, kernel_size):
    """Pure-JAX reference (lax conv on an edge-padded input) for verification."""
    k0, k1 = kernel_size
    p0 = (k0 - 1) // 2
    p1 = (k1 - 1) // 2
    xp = jnp.pad(
        x.astype(jnp.float32),
        ((0, 0), (p0, p0), (p1, p1), (p1, p1)),
        mode="edge",
    )
    y = lax.conv_general_dilated(
        xp[:, None],                       # [B, 1, Tp, Hp, Wp]
        weight.astype(jnp.float32),        # [1, 1, k0, k1, k1]
        window_strides=(1, 1, 1),
        padding="VALID",
        dimension_numbers=("NCDHW", "OIDHW", "NCDHW"),
    )
    return y + bias.reshape(1, 1, 1, 1, 1)


if __name__ == "__main__":
    # Module config: Conv3dC(kernel=(3, 3), bias=True) with default
    # in_channels=1, out_channels=1, groups=1, return_squeezed=False.
    kernel_size = (3, 3)
    B, T, H, W = 2, 8, 16, 16

    key = jax.random.PRNGKey(0)
    k_x, k_w, k_b = jax.random.split(key, 3)

    x = jax.random.normal(k_x, (B, T, H, W), dtype=jnp.float32)
    # Deterministic parameter init (shapes from nn.Conv3d(1, 1, (3, 3, 3))).
    fan_in = 1 * kernel_size[0] * kernel_size[1] * kernel_size[1]
    bound = 1.0 / float(fan_in) ** 0.5
    weight = jax.random.uniform(
        k_w, (1, 1, kernel_size[0], kernel_size[1], kernel_size[1]),
        dtype=jnp.float32, minval=-bound, maxval=bound)
    bias = jax.random.uniform(k_b, (1,), dtype=jnp.float32,
                              minval=-bound, maxval=bound)

    y = conv3dc_forward(x, weight, bias, kernel_size)
    y = jax.block_until_ready(y)

    y_ref = _reference_forward(x, weight, bias, kernel_size)
    assert y.shape == (B, 1, T, H, W), y.shape
    assert jnp.allclose(y, y_ref, atol=1e-5, rtol=1e-5), "mismatch vs reference"

    print("KERNEL_OK")
</pallas_src>

<mosaic_0001>
module attributes {stable_mosaic.version = 11 : i64} {
  func.func @kernel(%arg0: i32, %arg1: memref<27xf32, #tpu.memory_space<smem>>, %arg2: memref<1xf32, #tpu.memory_space<smem>>, %arg3: memref<8x256xf32, #tpu.memory_space<vmem>>, %arg4: memref<8x256xf32, #tpu.memory_space<vmem>>) attributes {dimension_semantics = [#tpu.dimension_semantics<parallel>], iteration_bounds = array<i64: 2>, scalar_prefetch = 0 : i64, scratch_operands = 0 : i64, tpu.core_type = #tpu.core_type<tc>, window_params = [{transform_indices = @transform_0, window_bounds = array<i64: 27>}, {transform_indices = @transform_1, window_bounds = array<i64: 1>}, {transform_indices = @transform_2, window_bounds = array<i64: 8, 256>}, {transform_indices = @transform_3, window_bounds = array<i64: 8, 256>}]} {
    %c0 = arith.constant 0 : index
    %c0_0 = arith.constant 0 : index
    %0 = vector.load %arg3[%c0, %c0_0] : memref<8x256xf32, #tpu.memory_space<vmem>>, vector<8x256xf32>
    %1 = tpu.iota {dimensions = array<i32: 1>} : vector<8x256xi32>
    %2 = tpu.iota {dimensions = array<i32: 0>} : vector<8x256xi32>
    %c8_i32 = arith.constant 8 : i32
    %c0_i32 = arith.constant 0 : i32
    %3 = arith.cmpi eq, %c8_i32, %c0_i32 : i32
    %c1_i32 = arith.constant 1 : i32
    %4 = arith.select %3, %c1_i32, %c8_i32 : i32
    %5 = vector.broadcast %4 : i32 to vector<8x256xi32>
    %6 = arith.remsi %2, %5 : vector<8x256xi32>
    %c0_i32_1 = arith.constant 0 : i32
    %7 = vector.broadcast %c0_i32_1 : i32 to vector<8x256xi32>
    %8 = arith.cmpi ne, %6, %7 : vector<8x256xi32>
    %c0_i32_2 = arith.constant 0 : i32
    %9 = vector.broadcast %c0_i32_2 : i32 to vector<8x256xi32>
    %10 = arith.cmpi slt, %6, %9 : vector<8x256xi32>
    %c0_i32_3 = arith.constant 0 : i32
    %11 = arith.cmpi slt, %4, %c0_i32_3 : i32
    %12 = vector.broadcast %11 : i1 to vector<8x256xi1>
    %13 = vector.broadcast %12 : vector<8x256xi1> to vector<8x256xi1>
    %14 = arith.xori %10, %13 : vector<8x256xi1>
    %15 = arith.andi %14, %8 : vector<8x256xi1>
    %16 = vector.broadcast %4 : i32 to vector<8x256xi32>
    %17 = arith.addi %6, %16 : vector<8x256xi32>
    %18 = arith.select %15, %17, %6 : vector<8x256xi1>, vector<8x256xi32>
    %c16_i32 = arith.constant 16 : i32
    %c0_i32_4 = arith.constant 0 : i32
    %19 = arith.cmpi eq, %c16_i32, %c0_i32_4 : i32
    %c1_i32_5 = arith.constant 1 : i32
    %20 = arith.select %19, %c1_i32_5, %c16_i32 : i32
    %21 = vector.broadcast %20 : i32 to vector<8x256xi32>
    %22 = arith.remsi %1, %21 : vector<8x256xi32>
    %c0_i32_6 = arith.constant 0 : i32
    %23 = vector.broadcast %c0_i32_6 : i32 to vector<8x256xi32>
    %24 = arith.cmpi ne, %22, %23 : vector<8x256xi32>
    %c0_i32_7 = arith.constant 0 : i32
    %25 = vector.broadcast %c0_i32_7 : i32 to vector<8x256xi32>
    %26 = arith.cmpi slt, %22, %25 : vector<8x256xi32>
    %c0_i32_8 = arith.constant 0 : i32
    %27 = arith.cmpi slt, %20, %c0_i32_8 : i32
    %28 = vector.broadcast %27 : i1 to vector<8x256xi1>
    %29 = vector.broadcast %28 : vector<8x256xi1> to vector<8x256xi1>
    %30 = arith.xori %26, %29 : vector<8x256xi1>
    %31 = arith.andi %30, %24 : vector<8x256xi1>
    %32 = vector.broadcast %20 : i32 to vector<8x256xi32>
    %33 = arith.addi %22, %32 : vector<8x256xi32>
    %34 = arith.select %31, %33, %22 : vector<8x256xi1>, vector<8x256xi32>
    %c0_i32_9 = arith.constant 0 : i32
    %35 = vector.broadcast %c0_i32_9 : i32 to vector<8x256xi32>
    %36 = arith.cmpi eq, %34, %35 : vector<8x256xi32>
    %c15_i32 = arith.constant 15 : i32
    %37 = vector.broadcast %c15_i32 : i32 to vector<8x256xi32>
    %38 = arith.cmpi eq, %34, %37 : vector<8x256xi32>
    %c16_i32_10 = arith.constant 16 : i32
    %39 = vector.broadcast %c16_i32_10 : i32 to vector<8x256xi32>
    %40 = arith.cmpi slt, %1, %39 : vector<8x256xi32>
    %c240_i32 = arith.constant 240 : i32
    %41 = vector.broadcast %c240_i32 : i32 to vector<8x256xi32>
    %42 = arith.cmpi sge, %1, %41 : vector<8x256xi32>
    %c0_i32_11 = arith.constant 0 : i32
    %43 = vector.broadcast %c0_i32_11 : i32 to vector<8x256xi32>
    %44 = arith.cmpi eq, %18, %43 : vector<8x256xi32>
    %c7_i32 = arith.constant 7 : i32
    %45 = vector.broadcast %c7_i32 : i32 to vector<8x256xi32>
    %46 = arith.cmpi eq, %18, %45 : vector<8x256xi32>
    %c1_i32_12 = arith.constant 1 : i32
    %47 = tpu.dynamic_rotate %0 by %c1_i32_12 dim 0 : vector<8x256xf32>, i32 -> vector<8x256xf32>
    %48 = arith.select %44, %0, %47 : vector<8x256xi1>, vector<8x256xf32>
    %c16_i32_13 = arith.constant 16 : i32
    %49 = tpu.dynamic_rotate %48 by %c16_i32_13 dim 1 : vector<8x256xf32>, i32 -> vector<8x256xf32>
    %50 = arith.select %40, %48, %49 : vector<8x256xi1>, vector<8x256xf32>
    %c1_i32_14 = arith.constant 1 : i32
    %51 = tpu.dynamic_rotate %50 by %c1_i32_14 dim 1 : vector<8x256xf32>, i32 -> vector<8x256xf32>
    %52 = arith.select %36, %50, %51 : vector<8x256xi1>, vector<8x256xf32>
    %c0_15 = arith.constant 0 : index
    %53 = memref.load %arg1[%c0_15] : memref<27xf32, #tpu.memory_space<smem>>
    %54 = vector.broadcast %53 : f32 to vector<8x256xf32>
    %55 = arith.mulf %54, %52 : vector<8x256xf32>
    %c1 = arith.constant 1 : index
    %56 = memref.load %arg1[%c1] : memref<27xf32, #tpu.memory_space<smem>>
    %57 = vector.broadcast %56 : f32 to vector<8x256xf32>
    %58 = arith.mulf %57, %50 : vector<8x256xf32>
    %59 = arith.addf %55, %58 : vector<8x256xf32>
    %c255_i32 = arith.constant 255 : i32
    %60 = tpu.dynamic_rotate %50 by %c255_i32 dim 1 : vector<8x256xf32>, i32 -> vector<8x256xf32>
    %61 = arith.select %38, %50, %60 : vector<8x256xi1>, vector<8x256xf32>
    %c2 = arith.constant 2 : index
    %62 = memref.load %arg1[%c2] : memref<27xf32, #tpu.memory_space<smem>>
    %63 = vector.broadcast %62 : f32 to vector<8x256xf32>
    %64 = arith.mulf %63, %61 : vector<8x256xf32>
    %65 = arith.addf %59, %64 : vector<8x256xf32>
    %c1_i32_16 = arith.constant 1 : i32
    %66 = tpu.dynamic_rotate %48 by %c1_i32_16 dim 1 : vector<8x256xf32>, i32 -> vector<8x256xf32>
    %67 = arith.select %36, %48, %66 : vector<8x256xi1>, vector<8x256xf32>
    %c3 = arith.constant 3 : index
    %68 = memref.load %arg1[%c3] : memref<27xf32, #tpu.memory_space<smem>>
    %69 = vector.broadcast %68 : f32 to vector<8x256xf32>
    %70 = arith.mulf %69, %67 : vector<8x256xf32>
    %c4 = arith.constant 4 : index
    %71 = memref.load %arg1[%c4] : memref<27xf32, #tpu.memory_space<smem>>
    %72 = vector.broadcast %71 : f32 to vector<8x256xf32>
    %73 = arith.mulf %72, %48 : vector<8x256xf32>
    %74 = arith.addf %70, %73 : vector<8x256xf32>
    %c255_i32_17 = arith.constant 255 : i32
    %75 = tpu.dynamic_rotate %48 by %c255_i32_17 dim 1 : vector<8x256xf32>, i32 -> vector<8x256xf32>
    %76 = arith.select %38, %48, %75 : vector<8x256xi1>, vector<8x256xf32>
    %c5 = arith.constant 5 : index
    %77 = memref.load %arg1[%c5] : memref<27xf32, #tpu.memory_space<smem>>
    %78 = vector.broadcast %77 : f32 to vector<8x256xf32>
    %79 = arith.mulf %78, %76 : vector<8x256xf32>
    %80 = arith.addf %74, %79 : vector<8x256xf32>
    %c240_i32_18 = arith.constant 240 : i32
    %81 = tpu.dynamic_rotate %48 by %c240_i32_18 dim 1 : vector<8x256xf32>, i32 -> vector<8x256xf32>
    %82 = arith.select %42, %48, %81 : vector<8x256xi1>, vector<8x256xf32>
    %c1_i32_19 = arith.constant 1 : i32
    %83 = tpu.dynamic_rotate %82 by %c1_i32_19 dim 1 : vector<8x256xf32>, i32 -> vector<8x256xf32>
    %84 = arith.select %36, %82, %83 : vector<8x256xi1>, vector<8x256xf32>
    %c6 = arith.constant 6 : index
    %85 = memref.load %arg1[%c6] : memref<27xf32, #tpu.memory_space<smem>>
    %86 = vector.broadcast %85 : f32 to vector<8x256xf32>
    %87 = arith.mulf %86, %84 : vector<8x256xf32>
    %c7 = arith.constant 7 : index
    %88 = memref.load %arg1[%c7] : memref<27xf32, #tpu.memory_space<smem>>
    %89 = vector.broadcast %88 : f32 to vector<8x256xf32>
    %90 = arith.mulf %89, %82 : vector<8x256xf32>
    %91 = arith.addf %87, %90 : vector<8x256xf32>
    %c255_i32_20 = arith.constant 255 : i32
    %92 = tpu.dynamic_rotate %82 by %c255_i32_20 dim 1 : vector<8x256xf32>, i32 -> vector<8x256xf32>
    %93 = arith.select %38, %82, %92 : vector<8x256xi1>, vector<8x256xf32>
    %c8 = arith.constant 8 : index
    %94 = memref.load %arg1[%c8] : memref<27xf32, #tpu.memory_space<smem>>
    %95 = vector.broadcast %94 : f32 to vector<8x256xf32>
    %96 = arith.mulf %95, %93 : vector<8x256xf32>
    %97 = arith.addf %91, %96 : vector<8x256xf32>
    %c16_i32_21 = arith.constant 16 : i32
    %98 = tpu.dynamic_rotate %0 by %c16_i32_21 dim 1 : vector<8x256xf32>, i32 -> vector<8x256xf32>
    %99 = arith.select %40, %0, %98 : vector<8x256xi1>, vector<8x256xf32>
    %c1_i32_22 = arith.constant 1 : i32
    %100 = tpu.dynamic_rotate %99 by %c1_i32_22 dim 1 : vector<8x256xf32>, i32 -> vector<8x256xf32>
    %101 = arith.select %36, %99, %100 : vector<8x256xi1>, vector<8x256xf32>
    %c9 = arith.constant 9 : index
    %102 = memref.load %arg1[%c9] : memref<27xf32, #tpu.memory_space<smem>>
    %103 = vector.broadcast %102 : f32 to vector<8x256xf32>
    %104 = arith.mulf %103, %101 : vector<8x256xf32>
    %c10 = arith.constant 10 : index
    %105 = memref.load %arg1[%c10] : memref<27xf32, #tpu.memory_space<smem>>
    %106 = vector.broadcast %105 : f32 to vector<8x256xf32>
    %107 = arith.mulf %106, %99 : vector<8x256xf32>
    %108 = arith.addf %104, %107 : vector<8x256xf32>
    %c255_i32_23 = arith.constant 255 : i32
    %109 = tpu.dynamic_rotate %99 by %c255_i32_23 dim 1 : vector<8x256xf32>, i32 -> vector<8x256xf32>
    %110 = arith.select %38, %99, %109 : vector<8x256xi1>, vector<8x256xf32>
    %c11 = arith.constant 11 : index
    %111 = memref.load %arg1[%c11] : memref<27xf32, #tpu.memory_space<smem>>
    %112 = vector.broadcast %111 : f32 to vector<8x256xf32>
    %113 = arith.mulf %112, %110 : vector<8x256xf32>
    %114 = arith.addf %108, %113 : vector<8x256xf32>
    %c1_i32_24 = arith.constant 1 : i32
    %115 = tpu.dynamic_rotate %0 by %c1_i32_24 dim 1 : vector<8x256xf32>, i32 -> vector<8x256xf32>
    %116 = arith.select %36, %0, %115 : vector<8x256xi1>, vector<8x256xf32>
    %c12 = arith.constant 12 : index
    %117 = memref.load %arg1[%c12] : memref<27xf32, #tpu.memory_space<smem>>
    %118 = vector.broadcast %117 : f32 to vector<8x256xf32>
    %119 = arith.mulf %118, %116 : vector<8x256xf32>
    %c13 = arith.constant 13 : index
    %120 = memref.load %arg1[%c13] : memref<27xf32, #tpu.memory_space<smem>>
    %121 = vector.broadcast %120 : f32 to vector<8x256xf32>
    %122 = arith.mulf %121, %0 : vector<8x256xf32>
    %123 = arith.addf %119, %122 : vector<8x256xf32>
    %c255_i32_25 = arith.constant 255 : i32
    %124 = tpu.dynamic_rotate %0 by %c255_i32_25 dim 1 : vector<8x256xf32>, i32 -> vector<8x256xf32>
    %125 = arith.select %38, %0, %124 : vector<8x256xi1>, vector<8x256xf32>
    %c14 = arith.constant 14 : index
    %126 = memref.load %arg1[%c14] : memref<27xf32, #tpu.memory_space<smem>>
    %127 = vector.broadcast %126 : f32 to vector<8x256xf32>
    %128 = arith.mulf %127, %125 : vector<8x256xf32>
    %129 = arith.addf %123, %128 : vector<8x256xf32>
    %c240_i32_26 = arith.constant 240 : i32
    %130 = tpu.dynamic_rotate %0 by %c240_i32_26 dim 1 : vector<8x256xf32>, i32 -> vector<8x256xf32>
    %131 = arith.select %42, %0, %130 : vector<8x256xi1>, vector<8x256xf32>
    %c1_i32_27 = arith.constant 1 : i32
    %132 = tpu.dynamic_rotate %131 by %c1_i32_27 dim 1 : vector<8x256xf32>, i32 -> vector<8x256xf32>
    %133 = arith.select %36, %131, %132 : vector<8x256xi1>, vector<8x256xf32>
    %c15 = arith.constant 15 : index
    %134 = memref.load %arg1[%c15] : memref<27xf32, #tpu.memory_space<smem>>
    %135 = vector.broadcast %134 : f32 to vector<8x256xf32>
    %136 = arith.mulf %135, %133 : vector<8x256xf32>
    %c16 = arith.constant 16 : index
    %137 = memref.load %arg1[%c16] : memref<27xf32, #tpu.memory_space<smem>>
    %138 = vector.broadcast %137 : f32 to vector<8x256xf32>
    %139 = arith.mulf %138, %131 : vector<8x256xf32>
    %140 = arith.addf %136, %139 : vector<8x256xf32>
    %c255_i32_28 = arith.constant 255 : i32
    %141 = tpu.dynamic_rotate %131 by %c255_i32_28 dim 1 : vector<8x256xf32>, i32 -> vector<8x256xf32>
    %142 = arith.select %38, %131, %141 : vector<8x256xi1>, vector<8x256xf32>
    %c17 = arith.constant 17 : index
    %143 = memref.load %arg1[%c17] : memref<27xf32, #tpu.memory_space<smem>>
    %144 = vector.broadcast %143 : f32 to vector<8x256xf32>
    %145 = arith.mulf %144, %142 : vector<8x256xf32>
    %146 = arith.addf %140, %145 : vector<8x256xf32>
    %c7_i32_29 = arith.constant 7 : i32
    %147 = tpu.dynamic_rotate %0 by %c7_i32_29 dim 0 : vector<8x256xf32>, i32 -> vector<8x256xf32>
    %148 = arith.select %46, %0, %147 : vector<8x256xi1>, vector<8x256xf32>
    %c16_i32_30 = arith.constant 16 : i32
    %149 = tpu.dynamic_rotate %148 by %c16_i32_30 dim 1 : vector<8x256xf32>, i32 -> vector<8x256xf32>
    %150 = arith.select %40, %148, %149 : vector<8x256xi1>, vector<8x256xf32>
    %c1_i32_31 = arith.constant 1 : i32
    %151 = tpu.dynamic_rotate %150 by %c1_i32_31 dim 1 : vector<8x256xf32>, i32 -> vector<8x256xf32>
    %152 = arith.select %36, %150, %151 : vector<8x256xi1>, vector<8x256xf32>
    %c18 = arith.constant 18 : index
    %153 = memref.load %arg1[%c18] : memref<27xf32, #tpu.memory_space<smem>>
    %154 = vector.broadcast %153 : f32 to vector<8x256xf32>
    %155 = arith.mulf %154, %152 : vector<8x256xf32>
    %c19 = arith.constant 19 : index
    %156 = memref.load %arg1[%c19] : memref<27xf32, #tpu.memory_space<smem>>
    %157 = vector.broadcast %156 : f32 to vector<8x256xf32>
    %158 = arith.mulf %157, %150 : vector<8x256xf32>
    %159 = arith.addf %155, %158 : vector<8x256xf32>
    %c255_i32_32 = arith.constant 255 : i32
    %160 = tpu.dynamic_rotate %150 by %c255_i32_32 dim 1 : vector<8x256xf32>, i32 -> vector<8x256xf32>
    %161 = arith.select %38, %150, %160 : vector<8x256xi1>, vector<8x256xf32>
    %c20 = arith.constant 20 : index
    %162 = memref.load %arg1[%c20] : memref<27xf32, #tpu.memory_space<smem>>
    %163 = vector.broadcast %162 : f32 to vector<8x256xf32>
    %164 = arith.mulf %163, %161 : vector<8x256xf32>
    %165 = arith.addf %159, %164 : vector<8x256xf32>
    %c1_i32_33 = arith.constant 1 : i32
    %166 = tpu.dynamic_rotate %148 by %c1_i32_33 dim 1 : vector<8x256xf32>, i32 -> vector<8x256xf32>
    %167 = arith.select %36, %148, %166 : vector<8x256xi1>, vector<8x256xf32>
    %c21 = arith.constant 21 : index
    %168 = memref.load %arg1[%c21] : memref<27xf32, #tpu.memory_space<smem>>
    %169 = vector.broadcast %168 : f32 to vector<8x256xf32>
    %170 = arith.mulf %169, %167 : vector<8x256xf32>
    %c22 = arith.constant 22 : index
    %171 = memref.load %arg1[%c22] : memref<27xf32, #tpu.memory_space<smem>>
    %172 = vector.broadcast %171 : f32 to vector<8x256xf32>
    %173 = arith.mulf %172, %148 : vector<8x256xf32>
    %174 = arith.addf %170, %173 : vector<8x256xf32>
    %c255_i32_34 = arith.constant 255 : i32
    %175 = tpu.dynamic_rotate %148 by %c255_i32_34 dim 1 : vector<8x256xf32>, i32 -> vector<8x256xf32>
    %176 = arith.select %38, %148, %175 : vector<8x256xi1>, vector<8x256xf32>
    %c23 = arith.constant 23 : index
    %177 = memref.load %arg1[%c23] : memref<27xf32, #tpu.memory_space<smem>>
    %178 = vector.broadcast %177 : f32 to vector<8x256xf32>
    %179 = arith.mulf %178, %176 : vector<8x256xf32>
    %180 = arith.addf %174, %179 : vector<8x256xf32>
    %c240_i32_35 = arith.constant 240 : i32
    %181 = tpu.dynamic_rotate %148 by %c240_i32_35 dim 1 : vector<8x256xf32>, i32 -> vector<8x256xf32>
    %182 = arith.select %42, %148, %181 : vector<8x256xi1>, vector<8x256xf32>
    %c1_i32_36 = arith.constant 1 : i32
    %183 = tpu.dynamic_rotate %182 by %c1_i32_36 dim 1 : vector<8x256xf32>, i32 -> vector<8x256xf32>
    %184 = arith.select %36, %182, %183 : vector<8x256xi1>, vector<8x256xf32>
    %c24 = arith.constant 24 : index
    %185 = memref.load %arg1[%c24] : memref<27xf32, #tpu.memory_space<smem>>
    %186 = vector.broadcast %185 : f32 to vector<8x256xf32>
    %187 = arith.mulf %186, %184 : vector<8x256xf32>
    %c25 = arith.constant 25 : index
    %188 = memref.load %arg1[%c25] : memref<27xf32, #tpu.memory_space<smem>>
    %189 = vector.broadcast %188 : f32 to vector<8x256xf32>
    %190 = arith.mulf %189, %182 : vector<8x256xf32>
    %191 = arith.addf %187, %190 : vector<8x256xf32>
    %c255_i32_37 = arith.constant 255 : i32
    %192 = tpu.dynamic_rotate %182 by %c255_i32_37 dim 1 : vector<8x256xf32>, i32 -> vector<8x256xf32>
    %193 = arith.select %38, %182, %192 : vector<8x256xi1>, vector<8x256xf32>
    %c26 = arith.constant 26 : index
    %194 = memref.load %arg1[%c26] : memref<27xf32, #tpu.memory_space<smem>>
    %195 = vector.broadcast %194 : f32 to vector<8x256xf32>
    %196 = arith.mulf %195, %193 : vector<8x256xf32>
    %197 = arith.addf %191, %196 : vector<8x256xf32>
    %198 = arith.addf %65, %80 : vector<8x256xf32>
    %199 = arith.addf %97, %114 : vector<8x256xf32>
    %200 = arith.addf %129, %146 : vector<8x256xf32>
    %201 = arith.addf %165, %180 : vector<8x256xf32>
    %202 = arith.addf %198, %199 : vector<8x256xf32>
    %203 = arith.addf %200, %201 : vector<8x256xf32>
    %204 = arith.addf %202, %203 : vector<8x256xf32>
    %205 = arith.addf %204, %197 : vector<8x256xf32>
    %c0_38 = arith.constant 0 : index
    %206 = memref.load %arg2[%c0_38] : memref<1xf32, #tpu.memory_space<smem>>
    %207 = vector.broadcast %206 : f32 to vector<8x256xf32>
    %208 = arith.addf %205, %207 : vector<8x256xf32>
    %c0_39 = arith.constant 0 : index
    %c0_40 = arith.constant 0 : index
    %209 = vector.load %arg4[%c0_39, %c0_40] : memref<8x256xf32, #tpu.memory_space<vmem>>, vector<8x256xf32>
    tpu.vector_store %arg4[%c0_39, %c0_40], %208 {strides = array<i32>} : memref<8x256xf32, #tpu.memory_space<vmem>>, vector<8x256xf32>,
    return
  }
  func.func @transform_0(%arg0: i32) -> i32 {
    %c0_i32 = arith.constant 0 : i32
    %c0_i32_0 = arith.constant 0 : i32
    return %c0_i32 : i32
  }
  func.func @transform_1(%arg0: i32) -> i32 {
    %c0_i32 = arith.constant 0 : i32
    %c0_i32_0 = arith.constant 0 : i32
    return %c0_i32 : i32
  }
  func.func @transform_2(%arg0: i32) -> (i32, i32) {
    %c0_i32 = arith.constant 0 : i32
    %c0_i32_0 = arith.constant 0 : i32
    return %arg0, %c0_i32 : i32, i32
  }
  func.func @transform_3(%arg0: i32) -> (i32, i32) {
    %c0_i32 = arith.constant 0 : i32
    %c0_i32_0 = arith.constant 0 : i32
    return %arg0, %c0_i32 : i32, i32
  }
}

</mosaic_0001>

<llo_original>
// kernel: tpu_custom_call.1
$region0: #{tpu_custom_call.1}
  #allocation0 [shape = 'u32[]', space=smem, size = 0x4, offset = 0x4, fixed_abs, tag = 'smem constant byte address 0x4 - core index']
  #allocation1 [shape = 'u32[144,128]{1,0:T(1,128)}', space=vmem, size = 0x12000, scoped, tag = 'internal scratch']
  #allocation2 [shape = 'f32[1]{0:T(128)S(6)}', space=smem, size = 0x200, scoped, tag = 'scoped memory for tpu_custom_call.1']
  %s0 = inlined_call_operand.vmem [shape: f32[27], index: 0, kind: input, shape index: {}]
  %s1 = inlined_call_operand.<no memory space> [shape: f32[1], index: 1, kind: input, shape index: {}]
  %s2 = inlined_call_operand.hbm [shape: f32[16,256], index: 2, kind: input, shape index: {}]
  %s3 = inlined_call_operand.hbm [shape: f32[16,256], index: 3, kind: output, shape index: {}]
  %s4 = sld [smem:[#allocation0]]
  $region53: #{tpu_custom_call.1} parent=0
    _
  %s6 = ssub.s32 1, %s4
  %s7 = scalar_select 0, %s6, %s4
  %8 = sst [smem:[#allocation2]] %s1
  $region1: #{tpu_custom_call.1} parent=0
    #allocation3 [shape = 'u8[512]{0}', space=smem, size = 0x200, scoped, tag = 'input window, operand 0, single buffered']
    #allocation4 [shape = 's32[2]{0}', space=sflag, size = 0x8, scoped, tag = 'scoped memory for tpu_custom_call.1']
    #allocation5 [shape = 's32[2]{0}', space=sflag, size = 0x8, scoped, tag = 'scoped memory for tpu_custom_call.1']
    #allocation6 [shape = 's32[2]{0}', space=sflag, size = 0x8, scoped, tag = 'scoped memory for tpu_custom_call.1']
    #allocation7 [shape = 'u8[16384]{0}', space=vmem, size = 0x4000, scoped, tag = 'input window, operand 2']
    #allocation8 [shape = 'u8[16384]{0}', space=vmem, size = 0x4000, scoped, tag = 'output window, operand 0']
    %9 = vsyncpa [#allocation6], 0
    %10 = vsyncpa [#allocation4], 0
    %s11 = scalar_lea.sflag [#allocation4], 1
    %12 = vsyncpa %s11, 0
    %13 = vsyncpa [#allocation5], 0
    %s14 = scalar_lea.sflag [#allocation5], 1
    %15 = vsyncpa %s14, 0
    loop: start=0, step=1, limit=4
    $region2: #{tpu_custom_call.1} parent=1 // loop_pre_header
      _
    $region3: #{tpu_custom_call.1} parent=1 // loop_header
      %s17 = sphi 0, %s21
      %p18 = scmp.ge.s32.totalorder %s17, 4
      %s25 = sphi 0, %s25
      %s27 = sphi 0, %s25
      %s28 = sphi 0, %s27
      %s42 = sphi 0, %s28
      %s46 = sphi 0, %s46
      %s48 = sphi 0, %s46
      %s49 = sphi 0, %s48
      %s63 = sphi 0, %s49
      %s69 = sphi 0, %s71
      %s72 = sphi 0, %s69
      %s73 = sphi 0, %s72
      %s89 = sphi 0, %s73
      %s95 = sphi 0, %s97
      %s98 = sphi 0, %s95
      %s99 = sphi 0, %s98
      %s115 = sphi 0, %s99
    $region4: #{tpu_custom_call.1} parent=1 // loop_header_branch
      %20 = sbr.rel (%p18) target = $region8
    $region5: #{tpu_custom_call.1} parent=1 // loop_body
      %s22 = ssub.s32 %s17, 1
      %s23 = ssub.s32 %s17, 2
      %s24 = sadd.s32 %s17, 1
      %s26 = sadd.s32 %s25, 1
      %p29 = scmp.eq.s32.totalorder %s17, 1
      %p30 = scmp.ne.s32.totalorder %s25, %s27
      %p31 = scmp.eq.s32.totalorder %s17, 0
      %p32 = por %p30, %p31
      %p33 = scmp.ne.s32.totalorder %s25, %s27
      %p34 = scmp.eq.s32.totalorder %s22, 1
      %p35 = por %p33, %p34
      %p36 = scmp.ne.s32.totalorder %s27, %s28
      %p37 = scmp.eq.s32.totalorder %s22, 0
      %p38 = por %p36, %p37
      %p39 = scmp.ne.s32.totalorder %s27, %s28
      %p40 = scmp.eq.s32.totalorder %s23, 1
      %p41 = por %p39, %p40
      %p43 = scmp.ne.s32.totalorder %s28, %s42
      %p44 = scmp.eq.s32.totalorder %s23, 0
      %p45 = por %p43, %p44
      %s47 = sadd.s32 %s46, 1
      %p50 = scmp.eq.s32.totalorder %s17, 1
      %p51 = scmp.ne.s32.totalorder %s46, %s48
      %p52 = scmp.eq.s32.totalorder %s17, 0
      %p53 = por %p51, %p52
      %p54 = scmp.ne.s32.totalorder %s46, %s48
      %p55 = scmp.eq.s32.totalorder %s22, 1
      %p56 = por %p54, %p55
      %p57 = scmp.ne.s32.totalorder %s48, %s49
      %p58 = scmp.eq.s32.totalorder %s22, 0
      %p59 = por %p57, %p58
      %p60 = scmp.ne.s32.totalorder %s48, %s49
      %p61 = scmp.eq.s32.totalorder %s23, 1
      %p62 = por %p60, %p61
      %p64 = scmp.ne.s32.totalorder %s49, %s63
      %p65 = scmp.eq.s32.totalorder %s23, 0
      %p66 = por %p64, %p65
      %s67 = ssub.s32 %s17, %s24
      %p68 = scmp.eq.s32.totalorder %s67, 0
      %s70 = sadd.s32 %s69, 1
      %s71 = scalar_select %p68, %s69, %s70
      %p74 = pneg %p68
      %p75 = scmp.eq.s32.totalorder %s17, 1
      %p76 = por %p74, %p75
      %p77 = scmp.ne.s32.totalorder %s69, %s72
      %p78 = scmp.eq.s32.totalorder %s17, 0
      %p79 = por %p77, %p78
      %p80 = scmp.ne.s32.totalorder %s69, %s72
      %p81 = scmp.eq.s32.totalorder %s22, 1
      %p82 = por %p80, %p81
      %p83 = scmp.ne.s32.totalorder %s72, %s73
      %p84 = scmp.eq.s32.totalorder %s22, 0
      %p85 = por %p83, %p84
      %p86 = scmp.ne.s32.totalorder %s72, %s73
      %p87 = scmp.eq.s32.totalorder %s23, 1
      %p88 = por %p86, %p87
      %p90 = scmp.ne.s32.totalorder %s73, %s89
      %p91 = scmp.eq.s32.totalorder %s23, 0
      %p92 = por %p90, %p91
      %s93 = ssub.s32 %s17, %s24
      %p94 = scmp.eq.s32.totalorder %s93, 0
      %s96 = sadd.s32 %s95, 1
      %s97 = scalar_select %p94, %s95, %s96
      %p100 = pneg %p94
      %p101 = scmp.eq.s32.totalorder %s17, 1
      %p102 = por %p100, %p101
      %p103 = scmp.ne.s32.totalorder %s95, %s98
      %p104 = scmp.eq.s32.totalorder %s17, 0
      %p105 = por %p103, %p104
      %p106 = scmp.ne.s32.totalorder %s95, %s98
      %p107 = scmp.eq.s32.totalorder %s22, 1
      %p108 = por %p106, %p107
      %p109 = scmp.ne.s32.totalorder %s98, %s99
      %p110 = scmp.eq.s32.totalorder %s22, 0
      %p111 = por %p109, %p110
      %p112 = scmp.ne.s32.totalorder %s98, %s99
      %p113 = scmp.eq.s32.totalorder %s23, 1
      %p114 = por %p112, %p113
      %p116 = scmp.ne.s32.totalorder %s99, %s115
      %p117 = scmp.eq.s32.totalorder %s23, 0
      %p118 = por %p116, %p117
      %p119 = scmp.le.s32.totalorder 1, %s17
      %p120 = scmp.lt.s32.totalorder %s17, 3
      %p121 = pnand %p119, %p120
      %p122 = pneg %p121
      // Predicated region
      $region9: #{tpu_custom_call.1} parent=5 // pred_check
        _
      $region10: #{tpu_custom_call.1} parent=5 // pred_check_branch
        %124 = sbr.rel (%p121) target = $region12
      $region11: #{tpu_custom_call.1} parent=5 // pred_region
        %s125 = ssub.s32 %s17, 1
        // Predicated region
        $region13: #{tpu_custom_call.1} parent=11 // pred_check
          %p126 = pneg %p38
        $region14: #{tpu_custom_call.1} parent=11 // pred_check_branch
          %128 = sbr.rel (%p126) target = $region16
        $region15: #{tpu_custom_call.1} parent=11 // pred_region
          %s130 = ssub.s32 16, 16
          %131 = vsyncadd [#allocation6], %s130
          %s133 = sshll.u32 %s0, 4
          %s134 = int_to_ptr.vmem [resolvable:$true] %s133
          %136 = dma.vmem_to_smem %s134, 16, [#allocation3], [#allocation6]
        $region16: #{tpu_custom_call.1} parent=11 // pred_fallthru
          _
        // Predicated region
        $region17: #{tpu_custom_call.1} parent=11 // pred_check
          %p137 = pneg %p59
        $region18: #{tpu_custom_call.1} parent=11 // pred_check_branch
          %139 = sbr.rel (%p137) target = $region20
        $region19: #{tpu_custom_call.1} parent=11 // pred_region
          _
        $region20: #{tpu_custom_call.1} parent=11 // pred_fallthru
          _
      $region12: #{tpu_custom_call.1} parent=5 // pred_fallthru
        _
      %p140 = scmp.lt.s32.totalorder %s17, 2
      // Predicated region
      $region21: #{tpu_custom_call.1} parent=5 // pred_check
        %p141 = pneg %p140
      $region22: #{tpu_custom_call.1} parent=5 // pred_check_branch
        %143 = sbr.rel (%p141) target = $region24
      $region23: #{tpu_custom_call.1} parent=5 // pred_region
        // Predicated region
        $region25: #{tpu_custom_call.1} parent=23 // pred_check
          %p144 = pneg %p79
        $region26: #{tpu_custom_call.1} parent=23 // pred_check_branch
          %146 = sbr.rel (%p144) target = $region28
        $region27: #{tpu_custom_call.1} parent=23 // pred_region
          %s147 = sand.u32 %s69, 1
          %s148 = scalar_lea.sflag [#allocation4], %s147
          %s149 = sand.u32 %s69, 1
          %s150 = smul.addr %s149, 16
          %s151 = scalar_lea.vmem [#allocation7], %s150
          %s153 = ssub.s32 256, 256
          %154 = vsyncadd %s148, %s153
          %s155 = smul.addr %s17, 2
          %s156 = smul.addr %s155, 128
          %s157 = scalar_lea.hbm %s2, %s156
          %s159 = sshll.u32 %s151, 4
          %s160 = int_to_ptr.vmem [resolvable:$true] %s159
          %162 = dma.hbm_to_vmem [thread:$0]  %s157, 256, %s160, %s148
        $region28: #{tpu_custom_call.1} parent=23 // pred_fallthru
          _
      $region24: #{tpu_custom_call.1} parent=5 // pred_fallthru
        _
      %p163 = scmp.le.s32.totalorder 1, %s17
      %p164 = scmp.lt.s32.totalorder %s17, 3
      %p165 = pnand %p163, %p164
      %p166 = pneg %p165
      // Predicated region
      $region29: #{tpu_custom_call.1} parent=5 // pred_check
        _
      $region30: #{tpu_custom_call.1} parent=5 // pred_check_branch
        %168 = sbr.rel (%p165) target = $region32
      $region31: #{tpu_custom_call.1} parent=5 // pred_region
        %s169 = ssub.s32 %s17, 1
        // Predicated region
        $region33: #{tpu_custom_call.1} parent=31 // pred_check
          %p170 = pneg %p38
        $region34: #{tpu_custom_call.1} parent=31 // pred_check_branch
          %172 = sbr.rel (%p170) target = $region36
        $region35: #{tpu_custom_call.1} parent=31 // pred_region
          %173 = dma.done [#allocation6], 16
        $region36: #{tpu_custom_call.1} parent=31 // pred_fallthru
          _
        %s174 = sand.u32 %s72, 1
        %s175 = scalar_lea.sflag [#allocation4], %s174
        %s176 = sand.u32 %s72, 1
        %s177 = smul.addr %s176, 16
        %s178 = scalar_lea.vmem [#allocation7], %s177
        // Predicated region
        $region37: #{tpu_custom_call.1} parent=31 // pred_check
          %p179 = pneg %p85
        $region38: #{tpu_custom_call.1} parent=31 // pred_check_branch
          %181 = sbr.rel (%p179) target = $region40
        $region39: #{tpu_custom_call.1} parent=31 // pred_region
          %182 = dma.done %s175, 256
        $region40: #{tpu_custom_call.1} parent=31 // pred_fallthru
          _
        %183 = sfence
        %p184 = pneg %p38
        %p185 = pneg %p35
        %p186 = pneg %p59
        %p187 = pneg %p56
        %s188 = sand.u32 %s72, 1
        %s189 = scalar_lea.sflag [#allocation4], %s188
        %s190 = sand.u32 %s72, 1
        %s191 = smul.addr %s190, 16
        %s192 = scalar_lea.vmem [#allocation7], %s191
        %p193 = pneg %p85
        %p194 = pneg %p82
        %p195 = pneg %p111
        %p196 = pneg %p108
        %s197 = sand.u32 %s98, 1
        %s198 = scalar_lea.sflag [#allocation5], %s197
        %s199 = sand.u32 %s98, 1
        %s200 = smul.addr %s199, 16
        %s201 = scalar_lea.vmem [#allocation8], %s200
        %v202 = vld [vmem:[%s178] sm:$0xff]
        %v203 = vld [vmem:[%s178 + $0x8] sm:$0xff]
        %v204 = vlaneseq
        %v205 = vand.u32 %v204, 127
        %v206 = vadd.s32 %v205, 128
        %v207 = vlaneseq
        %v208 = vshrl.u32 %v207, 7
        %vm209 = vcmp.lt.s32.totalorder %v208, 0
        %v210 = vsub.s32 0, %v208
        %v211 = vsel %vm209, %v210, %v208
        %v212 = vshrl.u32 %v211, 3
        %v213 = vand.u32 %v211, 7
        %v214 = vsub.s32 0, %v213
        %v215 = vsel %vm209, %v214, %v213
        %vm216 = vcmp.ne.s32.totalorder %v215, 0
        %vm217 = vcmp.lt.s32.totalorder %v215, 0
        %vm218 = vmand %vm217, %vm216
        %v219 = vadd.s32 %v215, 8
        %v220 = vsel %vm218, %v219, %v215
        %vm221 = vcmp.lt.s32.totalorder %v205, 0
        %v222 = vsub.s32 0, %v205
        %v223 = vsel %vm221, %v222, %v205
        %v224 = vshrl.u32 %v223, 4
        %v225 = vand.u32 %v223, 15
        %v226 = vsub.s32 0, %v225
        %v227 = vsel %vm221, %v226, %v225
        %vm228 = vcmp.lt.s32.totalorder %v206, 0
        %v229 = vsub.s32 0, %v206
        %v230 = vsel %vm228, %v229, %v206
        %v231 = vshrl.u32 %v230, 4
        %v232 = vand.u32 %v230, 15
        %v233 = vsub.s32 0, %v232
        %v234 = vsel %vm228, %v233, %v232
        %vm235 = vcmp.ne.s32.totalorder %v227, 0
        %vm236 = vcmp.ne.s32.totalorder %v234, 0
        %vm237 = vcmp.lt.s32.totalorder %v227, 0
        %vm238 = vcmp.lt.s32.totalorder %v234, 0
        %vm239 = vmand %vm237, %vm235
        %vm240 = vmand %vm238, %vm236
        %v241 = vadd.s32 %v227, 16
        %v242 = vadd.s32 %v234, 16
        %v243 = vsel %vm239, %v241, %v227
        %v244 = vsel %vm240, %v242, %v234
        %vm245 = vcmp.eq.s32.totalorder %v243, 0
        %vm246 = vcmp.eq.s32.totalorder %v244, 0
        %vm247 = vcmp.eq.s32.totalorder %v243, 15
        %vm248 = vcmp.eq.s32.totalorder %v244, 15
        %vm249 = vcmp.lt.s32.totalorder %v205, 16
        %vm250 = vcmp.lt.s32.totalorder %v206, 16
        %vm251 = vcmp.ge.s32.totalorder %v205, 240
        %vm252 = vcmp.ge.s32.totalorder %v206, 240
        %vm253 = vcmp.eq.s32.totalorder %v220, 0
        %vm254 = vcmp.eq.s32.totalorder %v220, 7
        %v255 = vrot.slane %v202, 7
        %v256 = vrot.slane %v203, 7
        %v257 = vsel %vm253, %v202, %v255
        %v258 = vsel %vm253, %v203, %v256
        %259 = vrot.lane.b32.xlu0 %v257, 16
        %v260 = vpop.permute.xlu0 %259
        %261 = vrot.lane.b32.xlu0 %v258, 16
        %v262 = vpop.permute.xlu0 %261
        %v263 = vsel %vm249, %v260, %v262
        %v264 = vsel %vm249, %v262, %v260
        %v265 = vsel %vm249, %v257, %v264
        %v266 = vsel %vm250, %v258, %v263
        %267 = vrot.lane.b32.xlu0 %v265, 1
        %v268 = vpop.permute.xlu0 %267
        %269 = vrot.lane.b32.xlu0 %v266, 1
        %v270 = vpop.permute.xlu0 %269
        %vm271 = vcmp.lt.s32.totalorder %v205, 1
        %v272 = vsel %vm271, %v268, %v270
        %v273 = vsel %vm271, %v270, %v268
        %v274 = vsel %vm245, %v265, %v273
        %v275 = vsel %vm246, %v266, %v272
        %s276 = sld [smem:[#allocation3]]
        %v277 = vstv %s276
        %v278 = vmul.f32 %v277, %v274
        %v279 = vmul.f32 %v277, %v275
        %s280 = sld [smem:[#allocation3 + $0x1]]
        %v281 = vstv %s280
        %v282 = vmul.f32 %v281, %v265
        %v283 = vmul.f32 %v281, %v266
        %v284 = vadd.f32 %v278, %v282
        %v285 = vadd.f32 %v279, %v283
        %286 = vrot.lane.b32.xlu0 %v265, 127
        %v287 = vpop.permute.xlu0 %286
        %288 = vrot.lane.b32.xlu0 %v266, 127
        %v289 = vpop.permute.xlu0 %288
        %vm290 = vcmp.lt.s32.totalorder %v205, 127
        %v291 = vsel %vm290, %v287, %v289
        %v292 = vsel %vm290, %v289, %v287
        %v293 = vsel %vm247, %v265, %v291
        %v294 = vsel %vm248, %v266, %v292
        %s295 = sld [smem:[#allocation3 + $0x2]]
        %v296 = vstv %s295
        %v297 = vmul.f32 %v296, %v293
        %v298 = vmul.f32 %v296, %v294
        %v299 = vadd.f32 %v284, %v297
        %v300 = vadd.f32 %v285, %v298
        %301 = vrot.lane.b32.xlu0 %v257, 1
        %v302 = vpop.permute.xlu0 %301
        %303 = vrot.lane.b32.xlu0 %v258, 1
        %v304 = vpop.permute.xlu0 %303
        %v305 = vsel %vm271, %v302, %v304
        %v306 = vsel %vm271, %v304, %v302
        %v307 = vsel %vm245, %v257, %v306
        %v308 = vsel %vm246, %v258, %v305
        %s309 = sld [smem:[#allocation3 + $0x3]]
        %v310 = vstv %s309
        %v311 = vmul.f32 %v310, %v307
        %v312 = vmul.f32 %v310, %v308
        %s313 = sld [smem:[#allocation3 + $0x4]]
        %v314 = vstv %s313
        %v315 = vmul.f32 %v314, %v257
        %v316 = vmul.f32 %v314, %v258
        %v317 = vadd.f32 %v311, %v315
        %v318 = vadd.f32 %v312, %v316
        %319 = vrot.lane.b32.xlu0 %v257, 127
        %v320 = vpop.permute.xlu0 %319
        %321 = vrot.lane.b32.xlu0 %v258, 127
        %v322 = vpop.permute.xlu0 %321
        %v323 = vsel %vm290, %v320, %v322
        %v324 = vsel %vm290, %v322, %v320
        %v325 = vsel %vm247, %v257, %v323
        %v326 = vsel %vm248, %v258, %v324
        %s327 = sld [smem:[#allocation3 + $0x5]]
        %v328 = vstv %s327
        %v329 = vmul.f32 %v328, %v325
        %v330 = vmul.f32 %v328, %v326
        %v331 = vadd.f32 %v317, %v329
        %v332 = vadd.f32 %v318, %v330
        %333 = vrot.lane.b32.xlu0 %v257, 112
        %v334 = vpop.permute.xlu0 %333
        %335 = vrot.lane.b32.xlu0 %v258, 112
        %v336 = vpop.permute.xlu0 %335
        %vm337 = vcmp.lt.s32.totalorder %v205, 112
        %v338 = vsel %vm337, %v334, %v336
        %v339 = vsel %vm337, %v336, %v334
        %v340 = vsel %vm251, %v257, %v338
        %v341 = vsel %vm252, %v258, %v339
        %342 = vrot.lane.b32.xlu0 %v340, 1
        %v343 = vpop.permute.xlu0 %342
        %344 = vrot.lane.b32.xlu0 %v341, 1
        %v345 = vpop.permute.xlu0 %344
        %v346 = vsel %vm271, %v343, %v345
        %v347 = vsel %vm271, %v345, %v343
        %v348 = vsel %vm245, %v340, %v347
        %v349 = vsel %vm246, %v341, %v346
        %s350 = sld [smem:[#allocation3 + $0x6]]
        %v351 = vstv %s350
        %v352 = vmul.f32 %v351, %v348
        %v353 = vmul.f32 %v351, %v349
        %s354 = sld [smem:[#allocation3 + $0x7]]
        %v355 = vstv %s354
        %v356 = vmul.f32 %v355, %v340
        %v357 = vmul.f32 %v355, %v341
        %v358 = vadd.f32 %v352, %v356
        %v359 = vadd.f32 %v353, %v357
        %360 = vrot.lane.b32.xlu0 %v340, 127
        %v361 = vpop.permute.xlu0 %360
        %362 = vrot.lane.b32.xlu0 %v341, 127
        %v363 = vpop.permute.xlu0 %362
        %v364 = vsel %vm290, %v361, %v363
        %v365 = vsel %vm290, %v363, %v361
        %v366 = vsel %vm247, %v340, %v364
        %v367 = vsel %vm248, %v341, %v365
        %s368 = sld [smem:[#allocation3 + $0x8]]
        %v369 = vstv %s368
        %v370 = vmul.f32 %v369, %v366
        %v371 = vmul.f32 %v369, %v367
        %v372 = vadd.f32 %v358, %v370
        %v373 = vadd.f32 %v359, %v371
        %374 = vrot.lane.b32.xlu0 %v202, 16
        %v375 = vpop.permute.xlu0 %374
        %376 = vrot.lane.b32.xlu0 %v203, 16
        %v377 = vpop.permute.xlu0 %376
        %v378 = vsel %vm249, %v375, %v377
        %v379 = vsel %vm249, %v377, %v375
        %v380 = vsel %vm249, %v202, %v379
        %v381 = vsel %vm250, %v203, %v378
        %382 = vrot.lane.b32.xlu0 %v380, 1
        %v383 = vpop.permute.xlu0 %382
        %384 = vrot.lane.b32.xlu0 %v381, 1
        %v385 = vpop.permute.xlu0 %384
        %v386 = vsel %vm271, %v383, %v385
        %v387 = vsel %vm271, %v385, %v383
        %v388 = vsel %vm245, %v380, %v387
        %v389 = vsel %vm246, %v381, %v386
        %s390 = sld [smem:[#allocation3 + $0x9]]
        %v391 = vstv %s390
        %v392 = vmul.f32 %v391, %v388
        %v393 = vmul.f32 %v391, %v389
        %s394 = sld [smem:[#allocation3 + $0xa]]
        %v395 = vstv %s394
        %v396 = vmul.f32 %v395, %v380
        %v397 = vmul.f32 %v395, %v381
        %v398 = vadd.f32 %v392, %v396
        %v399 = vadd.f32 %v393, %v397
        %400 = vrot.lane.b32.xlu0 %v380, 127
        %v401 = vpop.permute.xlu0 %400
        %402 = vrot.lane.b32.xlu0 %v381, 127
        %v403 = vpop.permute.xlu0 %402
        %v404 = vsel %vm290, %v401, %v403
        %v405 = vsel %vm290, %v403, %v401
        %v406 = vsel %vm247, %v380, %v404
        %v407 = vsel %vm248, %v381, %v405
        %s408 = sld [smem:[#allocation3 + $0xb]]
        %v409 = vstv %s408
        %v410 = vmul.f32 %v409, %v406
        %v411 = vmul.f32 %v409, %v407
        %v412 = vadd.f32 %v398, %v410
        %v413 = vadd.f32 %v399, %v411
        %414 = vrot.lane.b32.xlu0 %v202, 1
        %v415 = vpop.permute.xlu0 %414
        %416 = vrot.lane.b32.xlu0 %v203, 1
        %v417 = vpop.permute.xlu0 %416
        %v418 = vsel %vm271, %v415, %v417
        %v419 = vsel %vm271, %v417, %v415
        %v420 = vsel %vm245, %v202, %v419
        %v421 = vsel %vm246, %v203, %v418
        %s422 = sld [smem:[#allocation3 + $0xc]]
        %v423 = vstv %s422
        %v424 = vmul.f32 %v423, %v420
        %v425 = vmul.f32 %v423, %v421
        %s426 = sld [smem:[#allocation3 + $0xd]]
        %v427 = vstv %s426
        %v428 = vmul.f32 %v427, %v202
        %v429 = vmul.f32 %v427, %v203
        %v430 = vadd.f32 %v424, %v428
        %v431 = vadd.f32 %v425, %v429
        %432 = vrot.lane.b32.xlu0 %v202, 127
        %v433 = vpop.permute.xlu0 %432
        %434 = vrot.lane.b32.xlu0 %v203, 127
        %v435 = vpop.permute.xlu0 %434
        %v436 = vsel %vm290, %v433, %v435
        %v437 = vsel %vm290, %v435, %v433
        %v438 = vsel %vm247, %v202, %v436
        %v439 = vsel %vm248, %v203, %v437
        %s440 = sld [smem:[#allocation3 + $0xe]]
        %v441 = vstv %s440
        %v442 = vmul.f32 %v441, %v438
        %v443 = vmul.f32 %v441, %v439
        %v444 = vadd.f32 %v430, %v442
        %v445 = vadd.f32 %v431, %v443
        %446 = vrot.lane.b32.xlu0 %v202, 112
        %v447 = vpop.permute.xlu0 %446
        %448 = vrot.lane.b32.xlu0 %v203, 112
        %v449 = vpop.permute.xlu0 %448
        %v450 = vsel %vm337, %v447, %v449
        %v451 = vsel %vm337, %v449, %v447
        %v452 = vsel %vm251, %v202, %v450
        %v453 = vsel %vm252, %v203, %v451
        %454 = vrot.lane.b32.xlu0 %v452, 1
        %v455 = vpop.permute.xlu0 %454
        %456 = vrot.lane.b32.xlu0 %v453, 1
        %v457 = vpop.permute.xlu0 %456
        %v458 = vsel %vm271, %v455, %v457
        %v459 = vsel %vm271, %v457, %v455
        %v460 = vsel %vm245, %v452, %v459
        %v461 = vsel %vm246, %v453, %v458
        %s462 = sld [smem:[#allocation3 + $0xf]]
        %v463 = vstv %s462
        %v464 = vmul.f32 %v463, %v460
        %v465 = vmul.f32 %v463, %v461
        %s466 = sld [smem:[#allocation3 + $0x10]]
        %v467 = vstv %s466
        %v468 = vmul.f32 %v467, %v452
        %v469 = vmul.f32 %v467, %v453
        %v470 = vadd.f32 %v464, %v468
        %v471 = vadd.f32 %v465, %v469
        %472 = vrot.lane.b32.xlu0 %v452, 127
        %v473 = vpop.permute.xlu0 %472
        %474 = vrot.lane.b32.xlu0 %v453, 127
        %v475 = vpop.permute.xlu0 %474
        %v476 = vsel %vm290, %v473, %v475
        %v477 = vsel %vm290, %v475, %v473
        %v478 = vsel %vm247, %v452, %v476
        %v479 = vsel %vm248, %v453, %v477
        %s480 = sld [smem:[#allocation3 + $0x11]]
        %v481 = vstv %s480
        %v482 = vmul.f32 %v481, %v478
        %v483 = vmul.f32 %v481, %v479
        %v484 = vadd.f32 %v470, %v482
        %v485 = vadd.f32 %v471, %v483
        %v486 = vrot.slane %v202, 1
        %v487 = vrot.slane %v203, 1
        %v488 = vsel %vm254, %v202, %v486
        %v489 = vsel %vm254, %v203, %v487
        %490 = vrot.lane.b32.xlu0 %v488, 16
        %v491 = vpop.permute.xlu0 %490
        %492 = vrot.lane.b32.xlu0 %v489, 16
        %v493 = vpop.permute.xlu0 %492
        %v494 = vsel %vm249, %v491, %v493
        %v495 = vsel %vm249, %v493, %v491
        %v496 = vsel %vm249, %v488, %v495
        %v497 = vsel %vm250, %v489, %v494
        %498 = vrot.lane.b32.xlu0 %v496, 1
        %v499 = vpop.permute.xlu0 %498
        %500 = vrot.lane.b32.xlu0 %v497, 1
        %v501 = vpop.permute.xlu0 %500
        %v502 = vsel %vm271, %v499, %v501
        %v503 = vsel %vm271, %v501, %v499
        %v504 = vsel %vm245, %v496, %v503
        %v505 = vsel %vm246, %v497, %v502
        %s506 = sld [smem:[#allocation3 + $0x12]]
        %v507 = vstv %s506
        %v508 = vmul.f32 %v507, %v504
        %v509 = vmul.f32 %v507, %v505
        %s510 = sld [smem:[#allocation3 + $0x13]]
        %v511 = vstv %s510
        %v512 = vmul.f32 %v511, %v496
        %v513 = vmul.f32 %v511, %v497
        %v514 = vadd.f32 %v508, %v512
        %v515 = vadd.f32 %v509, %v513
        %516 = vrot.lane.b32.xlu0 %v496, 127
        %v517 = vpop.permute.xlu0 %516
        %518 = vrot.lane.b32.xlu0 %v497, 127
        %v519 = vpop.permute.xlu0 %518
        %v520 = vsel %vm290, %v517, %v519
        %v521 = vsel %vm290, %v519, %v517
        %v522 = vsel %vm247, %v496, %v520
        %v523 = vsel %vm248, %v497, %v521
        %s524 = sld [smem:[#allocation3 + $0x14]]
        %v525 = vstv %s524
        %v526 = vmul.f32 %v525, %v522
        %v527 = vmul.f32 %v525, %v523
        %v528 = vadd.f32 %v514, %v526
        %v529 = vadd.f32 %v515, %v527
        %530 = vrot.lane.b32.xlu0 %v488, 1
        %v531 = vpop.permute.xlu0 %530
        %532 = vrot.lane.b32.xlu0 %v489, 1
        %v533 = vpop.permute.xlu0 %532
        %v534 = vsel %vm271, %v531, %v533
        %v535 = vsel %vm271, %v533, %v531
        %v536 = vsel %vm245, %v488, %v535
        %v537 = vsel %vm246, %v489, %v534
        %s538 = sld [smem:[#allocation3 + $0x15]]
        %v539 = vstv %s538
        %v540 = vmul.f32 %v539, %v536
        %v541 = vmul.f32 %v539, %v537
        %s542 = sld [smem:[#allocation3 + $0x16]]
        %v543 = vstv %s542
        %v544 = vmul.f32 %v543, %v488
        %v545 = vmul.f32 %v543, %v489
        %v546 = vadd.f32 %v540, %v544
        %v547 = vadd.f32 %v541, %v545
        %548 = vrot.lane.b32.xlu0 %v488, 127
        %v549 = vpop.permute.xlu0 %548
        %550 = vrot.lane.b32.xlu0 %v489, 127
        %v551 = vpop.permute.xlu0 %550
        %v552 = vsel %vm290, %v549, %v551
        %v553 = vsel %vm290, %v551, %v549
        %v554 = vsel %vm247, %v488, %v552
        %v555 = vsel %vm248, %v489, %v553
        %s556 = sld [smem:[#allocation3 + $0x17]]
        %v557 = vstv %s556
        %v558 = vmul.f32 %v557, %v554
        %v559 = vmul.f32 %v557, %v555
        %v560 = vadd.f32 %v546, %v558
        %v561 = vadd.f32 %v547, %v559
        %562 = vrot.lane.b32.xlu0 %v488, 112
        %v563 = vpop.permute.xlu0 %562
        %564 = vrot.lane.b32.xlu0 %v489, 112
        %v565 = vpop.permute.xlu0 %564
        %v566 = vsel %vm337, %v563, %v565
        %v567 = vsel %vm337, %v565, %v563
        %v568 = vsel %vm251, %v488, %v566
        %v569 = vsel %vm252, %v489, %v567
        %570 = vrot.lane.b32.xlu0 %v568, 1
        %v571 = vpop.permute.xlu0 %570
        %572 = vrot.lane.b32.xlu0 %v569, 1
        %v573 = vpop.permute.xlu0 %572
        %v574 = vsel %vm271, %v571, %v573
        %v575 = vsel %vm271, %v573, %v571
        %v576 = vsel %vm245, %v568, %v575
        %v577 = vsel %vm246, %v569, %v574
        %s578 = sld [smem:[#allocation3 + $0x18]]
        %v579 = vstv %s578
        %v580 = vmul.f32 %v579, %v576
        %v581 = vmul.f32 %v579, %v577
        %s582 = sld [smem:[#allocation3 + $0x19]]
        %v583 = vstv %s582
        %v584 = vmul.f32 %v583, %v568
        %v585 = vmul.f32 %v583, %v569
        %v586 = vadd.f32 %v580, %v584
        %v587 = vadd.f32 %v581, %v585
        %588 = vrot.lane.b32.xlu0 %v568, 127
        %v589 = vpop.permute.xlu0 %588
        %590 = vrot.lane.b32.xlu0 %v569, 127
        %v591 = vpop.permute.xlu0 %590
        %v592 = vsel %vm290, %v589, %v591
        %v593 = vsel %vm290, %v591, %v589
        %v594 = vsel %vm247, %v568, %v592
        %v595 = vsel %vm248, %v569, %v593
        %s596 = sld [smem:[#allocation3 + $0x1a]]
        %v597 = vstv %s596
        %v598 = vmul.f32 %v597, %v594
        %v599 = vmul.f32 %v597, %v595
        %v600 = vadd.f32 %v586, %v598
        %v601 = vadd.f32 %v587, %v599
        %v602 = vadd.f32 %v299, %v331
        %v603 = vadd.f32 %v300, %v332
        %v604 = vadd.f32 %v372, %v412
        %v605 = vadd.f32 %v373, %v413
        %v606 = vadd.f32 %v444, %v484
        %v607 = vadd.f32 %v445, %v485
        %v608 = vadd.f32 %v528, %v560
        %v609 = vadd.f32 %v529, %v561
        %v610 = vadd.f32 %v602, %v604
        %v611 = vadd.f32 %v603, %v605
        %v612 = vadd.f32 %v606, %v608
        %v613 = vadd.f32 %v607, %v609
        %v614 = vadd.f32 %v610, %v612
        %v615 = vadd.f32 %v611, %v613
        %v616 = vadd.f32 %v614, %v600
        %v617 = vadd.f32 %v615, %v601
        %s618 = sld [smem:[#allocation2]]
        %v619 = vstv %s618
        %v620 = vadd.f32 %v616, %v619
        %v621 = vadd.f32 %v617, %v619
        %622 = vst [vmem:[%s201] sm:$0xff] %v620
        %623 = vst [vmem:[%s201 + $0x8] sm:$0xff] %v621
        %s624 = sand.u32 %s98, 1
        %s625 = scalar_lea.sflag [#allocation5], %s624
        %s626 = sand.u32 %s98, 1
        %s627 = smul.addr %s626, 16
        %s628 = scalar_lea.vmem [#allocation8], %s627
        // Predicated region
        $region41: #{tpu_custom_call.1} parent=31 // pred_check
          %p629 = pneg %p108
        $region42: #{tpu_custom_call.1} parent=31 // pred_check_branch
          %631 = sbr.rel (%p629) target = $region44
        $region43: #{tpu_custom_call.1} parent=31 // pred_region
          %s633 = ssub.s32 256, 256
          %634 = vsyncadd %s625, %s633
          %s635 = smul.addr %s22, 2
          %s636 = smul.addr %s635, 128
          %s637 = scalar_lea.hbm %s3, %s636
          %s639 = sshll.u32 %s628, 4
          %s640 = int_to_ptr.vmem [resolvable:$true] %s639
          %642 = dma.vmem_to_hbm [thread:$0]  %s640, 256, %s637, %s625
        $region44: #{tpu_custom_call.1} parent=31 // pred_fallthru
          _
      $region32: #{tpu_custom_call.1} parent=5 // pred_fallthru
        _
      %p643 = scmp.le.s32.totalorder 2, %s17
      // Predicated region
      $region45: #{tpu_custom_call.1} parent=5 // pred_check
        %p644 = pneg %p643
      $region46: #{tpu_custom_call.1} parent=5 // pred_check_branch
        %646 = sbr.rel (%p644) target = $region48
      $region47: #{tpu_custom_call.1} parent=5 // pred_region
        %s647 = ssub.s32 %s17, 2
        // Predicated region
        $region49: #{tpu_custom_call.1} parent=47 // pred_check
          %p648 = pneg %p114
        $region50: #{tpu_custom_call.1} parent=47 // pred_check_branch
          %650 = sbr.rel (%p648) target = $region52
        $region51: #{tpu_custom_call.1} parent=47 // pred_region
          %s651 = sand.u32 %s99, 1
          %s652 = scalar_lea.sflag [#allocation5], %s651
          %s653 = sand.u32 %s99, 1
          %s654 = smul.addr %s653, 16
          %s655 = scalar_lea.vmem [#allocation8], %s654
          %656 = dma.done %s652, 256
        $region52: #{tpu_custom_call.1} parent=47 // pred_fallthru
          _
      $region48: #{tpu_custom_call.1} parent=5 // pred_fallthru
        _
    $region6: #{tpu_custom_call.1} parent=1 // loop_footer
      %s21 = sadd.s32 1, %s17
    $region7: #{tpu_custom_call.1} parent=1 // loop_footer_branch
      %16 = sbr.rel target = $region3
    $region8: #{tpu_custom_call.1} parent=1 // loop_exit
      _
    %657 = vsyncpa [#allocation4], 1
    %s658 = scalar_lea.sflag [#allocation4], 1
    %659 = vsyncpa %s658, 1
    %660 = vsyncpa [#allocation5], 1
    %s661 = scalar_lea.sflag [#allocation5], 1
    %662 = vsyncpa %s661, 1
    %663 = vsyncpa [#allocation6], 1
    %s664 = scalar_lea.sflag [#allocation6], 1
    %665 = vsyncpa %s664, 1

</llo_original>
